<compile_context>
chip_gen: v6e
topology: v6e:2x2x1
jax: 0.10.0
libtpu: 0.0.40
codegen_flags: <defaults>
</compile_context>

<pallas_src>
import functools

import jax
import jax.numpy as jnp
from jax.experimental import pallas as pl
from jax.experimental.pallas import tpu as pltpu


# ---------------------------------------------------------------------------
# GIoU, lane-dense layout (kernel-side): boxes are (bB, 4, nq), rows = x,y,w,h
# ---------------------------------------------------------------------------
def _giou_lane_dense(b1, b2, eps=1e-7):
    x1, y1, w1, h1 = b1[:, 0:1, :], b1[:, 1:2, :], b1[:, 2:3, :], b1[:, 3:4, :]
    x2, y2, w2, h2 = b2[:, 0:1, :], b2[:, 1:2, :], b2[:, 2:3, :], b2[:, 3:4, :]
    w1_, h1_, w2_, h2_ = w1 * 0.5, h1 * 0.5, w2 * 0.5, h2 * 0.5
    b1_x1, b1_x2, b1_y1, b1_y2 = x1 - w1_, x1 + w1_, y1 - h1_, y1 + h1_
    b2_x1, b2_x2, b2_y1, b2_y2 = x2 - w2_, x2 + w2_, y2 - h2_, y2 + h2_

    inter = (jnp.maximum(jnp.minimum(b1_x2, b2_x2) - jnp.maximum(b1_x1, b2_x1), 0.0) *
             jnp.maximum(jnp.minimum(b1_y2, b2_y2) - jnp.maximum(b1_y1, b2_y1), 0.0))
    union = w1 * h1 + w2 * h2 - inter + eps
    iou = inter * pl.reciprocal(union, approx=True)

    cw = jnp.maximum(b1_x2, b2_x2) - jnp.minimum(b1_x1, b2_x1)
    ch = jnp.maximum(b1_y2, b2_y2) - jnp.minimum(b1_y1, b2_y1)
    c_area = cw * ch + eps
    return iou - (c_area - union) * pl.reciprocal(c_area, approx=True)   # (bB, 1, nq)


# ---------------------------------------------------------------------------
# Pallas kernel: one batch-block (bB elements) per grid step, 3 partial sums
# ---------------------------------------------------------------------------
def _loss_kernel(s_bb_ref, t_bb_ref, s_sc_ref, t_sc_ref, out_ref, *,
                 s_dn, t_dn, nq, cls_dtype):
    bB = s_bb_ref.shape[0]

    # ---- class branch: score refs are (bB, Qt, C); skip dn queries in VMEM.
    s_sc = s_sc_ref[:, pl.ds(s_dn, nq), :].astype(cls_dtype)        # (bB, nq, C)
    t_sc = t_sc_ref[:, pl.ds(t_dn, nq), :].astype(cls_dtype)        # (bB, nq, C)

    t_sig = jax.nn.sigmoid(t_sc)                                    # (bB, nq, C)
    # teacher objectness (queries on sublanes); f32 accumulation
    t_obj = jnp.max(t_sig, axis=-1, keepdims=True).astype(jnp.float32)   # (bB, nq, 1)

    # BCEWithLogits(s_sc, sigmoid(t_sc)) -- numerically stable form.
    bce = (jnp.maximum(s_sc, 0.0) - s_sc * t_sig
           + jnp.log1p(jnp.exp(-jnp.abs(s_sc))))
    bce_sum = jnp.sum(bce.astype(jnp.float32))

    # ---- box branch (lane-dense: 4 coords on sublanes, queries on lanes) ----
    s_bb = s_bb_ref[...].astype(jnp.float32)                        # (bB, 4, nq)
    t_bb = t_bb_ref[...].astype(jnp.float32)                        # (bB, 4, nq)
    l1_per_q = jnp.sum(jnp.abs(s_bb - t_bb), axis=1, keepdims=True)      # (bB, 1, nq)
    one_minus_giou = 1.0 - _giou_lane_dense(s_bb, t_bb)                  # (bB, 1, nq)

    # power_transform(t_obj): t<0.5 -> t^2 else sqrt(t)   (sqrt avoids 0*inf)
    pw = jnp.where(t_obj < 0.5, t_obj * t_obj, jnp.sqrt(t_obj))          # (bB, nq, 1)

    # Weighted reductions as tiny (1,nq)x(nq,1) matmuls on the idle MXU; also
    # avoids relayouting t_obj/pw from sublanes to lanes.  bB is a small
    # static int, so this unrolls into a handful of MXU pushes.
    l1_sum = jnp.zeros((), jnp.float32)
    iou_sum = jnp.zeros((), jnp.float32)
    for i in range(bB):
        l1_sum = l1_sum + jnp.dot(l1_per_q[i], t_obj[i],
                                  preferred_element_type=jnp.float32)[0, 0]
        iou_sum = iou_sum + jnp.dot(one_minus_giou[i], pw[i],
                                    preferred_element_type=jnp.float32)[0, 0]

    # ---- emit the three per-block partials into lanes 0..2 of sublane 0 -----
    lane = jax.lax.broadcasted_iota(jnp.int32, (8, 128), 1)
    sub = jax.lax.broadcasted_iota(jnp.int32, (8, 128), 0)
    vals = jnp.where((sub == 0) & (lane == 0), l1_sum, 0.0)
    vals = jnp.where((sub == 0) & (lane == 1), iou_sum, vals)
    vals = jnp.where((sub == 0) & (lane == 2), bce_sum, vals)
    out_ref[...] = vals


def _pick_batch_block(B, Qt, C, itemsize, *, max_bb=8,
                      vmem_budget_bytes=8 * 1024 * 1024):
    """Largest divisor of B <= max_bb that fits the VMEM budget and (when
    possible) keeps >= 2 grid steps so v7x megacore can split the batch."""
    # 2 score tensors x 2 pipeline buffers per batch element in the block.
    per_elem = max(1, 2 * 2 * Qt * C * itemsize)
    cap = max(1, min(max_bb, vmem_budget_bytes // per_elem))
    divisors = [d for d in range(1, min(B, cap) + 1) if B % d == 0]
    two_step = [d for d in divisors if B // d >= 2]
    return max(two_step) if two_step else max(divisors)


def _partial_sums(s_bb, t_bb, s_scores, t_scores, *, s_dn, t_dn, nq, bB,
                  cls_dtype):
    B = s_bb.shape[0]
    Ls, _, Qts, C = s_scores.shape
    Lt, _, Qtt, _ = t_scores.shape
    nblocks = B // bB

    kernel = functools.partial(_loss_kernel, s_dn=s_dn, t_dn=t_dn, nq=nq,
                               cls_dtype=cls_dtype)

    return pl.pallas_call(
        kernel,
        out_shape=jax.ShapeDtypeStruct((nblocks, 8, 128), jnp.float32),
        grid_spec=pltpu.PrefetchScalarGridSpec(
            num_scalar_prefetch=0,
            grid=(nblocks,),
            in_specs=[
                pl.BlockSpec((bB, 4, nq), lambda b: (b, 0, 0)),
                pl.BlockSpec((bB, 4, nq), lambda b: (b, 0, 0)),
                # full score tensors stay in HBM; the index_map picks the LAST
                # decoder layer, so the other layers are never DMA'd.
                pl.BlockSpec((None, bB, Qts, C), lambda b: (Ls - 1, b, 0, 0)),
                pl.BlockSpec((None, bB, Qtt, C), lambda b: (Lt - 1, b, 0, 0)),
            ],
            out_specs=pl.BlockSpec((None, 8, 128), lambda b: (b, 0, 0)),
        ),
        compiler_params=pltpu.CompilerParams(
            # Independent per-block partials -> megacore (v7x) can split the
            # grid across both TensorCores; partials are summed in the wrapper.
            dimension_semantics=("parallel",)),
    )(s_bb, t_bb, s_scores, t_scores)


# ---------------------------------------------------------------------------
# Forward wrapper (mirrors RTDETRLogicLoss.forward)
# ---------------------------------------------------------------------------
def rtdetr_logic_loss(s_p, t_p, batch, *, bf16_transcendentals=None,
                      max_batch_block=8):
    # bf16_transcendentals: None = auto (bf16 class-branch compute whenever the
    # score tensors are bf16 -- the right default on v6e/v7x); True forces
    # bf16 compute; False forces f32 (exact-parity / v5e).  Accumulation is
    # always f32.
    s_dec_bboxes, s_dec_scores, _, _, s_dn_meta = s_p
    t_dec_bboxes, t_dec_scores, _, _, t_dn_meta = t_p

    # dn counts are forced static -> a change in dn query count recompiles.
    s_dn = int(s_dn_meta['dn_num_split'][0]) if s_dn_meta is not None else 0
    t_dn = int(t_dn_meta['dn_num_split'][0]) if t_dn_meta is not None else 0

    Ls, B, Qts_b, _ = s_dec_bboxes.shape
    Lt = t_dec_bboxes.shape[0]
    nq = Qts_b - s_dn
    assert t_dec_bboxes.shape[2] - t_dn == nq, "student/teacher query counts differ"

    Qts, C = s_dec_scores.shape[2], s_dec_scores.shape[3]

    scores_bf16 = (s_dec_scores.dtype == jnp.bfloat16
                   and t_dec_scores.dtype == jnp.bfloat16)
    if bf16_transcendentals is None:
        use_bf16 = scores_bf16
    else:
        use_bf16 = bool(bf16_transcendentals)
    cls_dtype = jnp.bfloat16 if use_bf16 else jnp.float32

    bB = _pick_batch_block(B, Qts, C, jnp.dtype(s_dec_scores.dtype).itemsize,
                           max_bb=max_batch_block)

    # Bboxes are tiny (B*nq*4): slice last layer / real queries and make them
    # lane-dense (queries on the lane axis) in the wrapper.  No dtype cast --
    # widening happens inside the kernel.
    s_bb = jnp.swapaxes(s_dec_bboxes[Ls - 1, :, s_dn:, :], -1, -2)   # (B, 4, nq)
    t_bb = jnp.swapaxes(t_dec_bboxes[Lt - 1, :, t_dn:, :], -1, -2)   # (B, 4, nq)

    partials = _partial_sums(s_bb, t_bb, s_dec_scores, t_dec_scores,
                             s_dn=s_dn, t_dn=t_dn, nq=nq, bB=bB,
                             cls_dtype=cls_dtype)

    # Single combined reduction of the three partial sums.
    sums = jnp.sum(partials[:, 0, :3], axis=0)          # [l1_sum, iou_sum, bce_sum]

    n_gt = batch['bboxes'].shape[0]
    lbox_l1 = sums[0] / n_gt * 5.0
    lbox_iou = sums[1] / n_gt * 2.0
    # bce.mean(axis=queries).sum() / (n_gt / nq)  ==  bce_sum / n_gt
    lcls = sums[2] / n_gt
    return lbox_l1 + lbox_iou + lcls


# ---------------------------------------------------------------------------
# Pure-JAX reference (literal transcription of the torch forward)
# ---------------------------------------------------------------------------
def _giou_xywh_ref(b1, b2, eps=1e-7):
    x1, y1, w1, h1 = b1[..., 0:1], b1[..., 1:2], b1[..., 2:3], b1[..., 3:4]
    x2, y2, w2, h2 = b2[..., 0:1], b2[..., 1:2], b2[..., 2:3], b2[..., 3:4]
    w1_, h1_, w2_, h2_ = w1 * 0.5, h1 * 0.5, w2 * 0.5, h2 * 0.5
    b1_x1, b1_x2, b1_y1, b1_y2 = x1 - w1_, x1 + w1_, y1 - h1_, y1 + h1_
    b2_x1, b2_x2, b2_y1, b2_y2 = x2 - w2_, x2 + w2_, y2 - h2_, y2 + h2_
    inter = (jnp.maximum(jnp.minimum(b1_x2, b2_x2) - jnp.maximum(b1_x1, b2_x1), 0.0) *
             jnp.maximum(jnp.minimum(b1_y2, b2_y2) - jnp.maximum(b1_y1, b2_y1), 0.0))
    union = w1 * h1 + w2 * h2 - inter + eps
    iou = inter / union
    cw = jnp.maximum(b1_x2, b2_x2) - jnp.minimum(b1_x1, b2_x1)
    ch = jnp.maximum(b1_y2, b2_y2) - jnp.minimum(b1_y1, b2_y1)
    c_area = cw * ch + eps
    return iou - (c_area - union) / c_area


def _ref_loss(s_p, t_p, batch):
    s_bb, s_sc, _, _, s_dn = s_p
    t_bb, t_sc, _, _, t_dn = t_p
    if s_dn is not None:
        dn = s_dn['dn_num_split'][0]
        s_bb, s_sc = s_bb[-1:, :, dn:, :], s_sc[-1:, :, dn:, :]
    if t_dn is not None:
        dn = t_dn['dn_num_split'][0]
        t_bb, t_sc = t_bb[-1:, :, dn:, :], t_sc[-1:, :, dn:, :]
    s_bb = s_bb.astype(jnp.float32); t_bb = t_bb.astype(jnp.float32)
    s_sc = s_sc.astype(jnp.float32); t_sc = t_sc.astype(jnp.float32)
    t_sig = jax.nn.sigmoid(t_sc)
    t_obj = jnp.max(t_sig, axis=-1, keepdims=True)
    lbox_l1 = jnp.abs(s_bb - t_bb) * t_obj
    pw = jnp.where(t_obj < 0.5, t_obj ** 2, t_obj ** 0.5)
    lbox_iou = (1.0 - _giou_xywh_ref(s_bb, t_bb)) * pw
    bce = jnp.maximum(s_sc, 0.0) - s_sc * t_sig + jnp.log1p(jnp.exp(-jnp.abs(s_sc)))
    lcls = bce.mean(2)
    n_gt = batch['bboxes'].shape[0]
    Q = t_obj.shape[2]
    return lbox_l1.sum() / n_gt * 5.0 + lbox_iou.sum() / n_gt * 2.0 + lcls.sum() / (n_gt / Q)


if __name__ == "__main__":
    key = jax.random.PRNGKey(0)
    L, B, C = 3, 4, 32          # decoder layers, batch, num classes
    dn_q, q = 8, 16             # denoising queries, real queries
    Qt = dn_q + q
    n_gt = 5                    # number of GT boxes in the batch

    ks = jax.random.split(key, 7)
    s_dec_bboxes = jax.random.uniform(ks[0], (L, B, Qt, 4), jnp.float32, 0.05, 0.95)
    t_dec_bboxes = jax.random.uniform(ks[1], (L, B, Qt, 4), jnp.float32, 0.05, 0.95)
    s_dec_scores = jax.random.normal(ks[2], (L, B, Qt, C), jnp.float32)
    t_dec_scores = jax.random.normal(ks[3], (L, B, Qt, C), jnp.float32)
    s_enc_bboxes = jax.random.uniform(ks[4], (B, q, 4), jnp.float32)   # unused by forward
    s_enc_scores = jax.random.normal(ks[5], (B, q, C), jnp.float32)    # unused by forward
    dn_meta = {'dn_num_split': [dn_q, q]}

    s_p = (s_dec_bboxes, s_dec_scores, s_enc_bboxes, s_enc_scores, dn_meta)
    t_p = (t_dec_bboxes, t_dec_scores, s_enc_bboxes, s_enc_scores, dn_meta)
    batch = {'bboxes': jax.random.uniform(ks[6], (n_gt, 4), jnp.float32)}

    # --- f32 path: strict check against the pure-JAX reference ---------------
    loss = jax.block_until_ready(rtdetr_logic_loss(s_p, t_p, batch))
    ref = jax.block_until_ready(_ref_loss(s_p, t_p, batch))
    assert abs(float(loss) - float(ref)) <= 1e-3 * max(1.0, abs(float(ref))), (loss, ref)

    # --- bf16-in-HBM path (halved DMA traffic; bf16 EUP auto-enabled) --------
    bf = lambda x: x.astype(jnp.bfloat16)
    s_p16 = (bf(s_dec_bboxes), bf(s_dec_scores), s_enc_bboxes, s_enc_scores, dn_meta)
    t_p16 = (bf(t_dec_bboxes), bf(t_dec_scores), s_enc_bboxes, s_enc_scores, dn_meta)
    loss16 = jax.block_until_ready(rtdetr_logic_loss(s_p16, t_p16, batch))
    assert abs(float(loss16) - float(ref)) <= 4e-2 * max(1.0, abs(float(ref))), (loss16, ref)

    # bf16 transcendentals can be forced off for exact parity / v5e:
    loss16_f32 = jax.block_until_ready(
        rtdetr_logic_loss(s_p16, t_p16, batch, bf16_transcendentals=False))
    assert abs(float(loss16_f32) - float(ref)) <= 2e-2 * max(1.0, abs(float(ref))), (loss16_f32, ref)

    print("KERNEL_OK")
</pallas_src>

<mosaic_0001>
module attributes {stable_mosaic.version = 11 : i64} {
  func.func @_loss_kernel(%arg0: i32, %arg1: memref<2x4x16xf32, #tpu.memory_space<vmem>>, %arg2: memref<2x4x16xf32, #tpu.memory_space<vmem>>, %arg3: memref<1x2x24x32xf32, #tpu.memory_space<vmem>>, %arg4: memref<1x2x24x32xf32, #tpu.memory_space<vmem>>, %arg5: memref<1x8x128xf32, #tpu.memory_space<vmem>>) attributes {dimension_semantics = [#tpu.dimension_semantics<parallel>], iteration_bounds = array<i64: 2>, scalar_prefetch = 0 : i64, scratch_operands = 0 : i64, tpu.core_type = #tpu.core_type<tc>, window_params = [{transform_indices = @transform_0, window_bounds = array<i64: 2, 4, 16>}, {transform_indices = @transform_1, window_bounds = array<i64: 2, 4, 16>}, {transform_indices = @transform_2, window_bounds = array<i64: 1, 2, 24, 32>}, {transform_indices = @transform_3, window_bounds = array<i64: 1, 2, 24, 32>}, {transform_indices = @transform_4, window_bounds = array<i64: 1, 8, 128>}]} {
    %c0 = arith.constant 0 : index
    %c0_0 = arith.constant 0 : index
    %c8 = arith.constant 8 : index
    %c0_1 = arith.constant 0 : index
    %0 = vector.load %arg3[%c0, %c0_0, %c8, %c0_1] : memref<1x2x24x32xf32, #tpu.memory_space<vmem>>, vector<1x2x16x32xf32>
    %1 = vector.shape_cast %0 : vector<1x2x16x32xf32> to vector<2x16x32xf32>
    %c0_2 = arith.constant 0 : index
    %c0_3 = arith.constant 0 : index
    %c8_4 = arith.constant 8 : index
    %c0_5 = arith.constant 0 : index
    %2 = vector.load %arg4[%c0_2, %c0_3, %c8_4, %c0_5] : memref<1x2x24x32xf32, #tpu.memory_space<vmem>>, vector<1x2x16x32xf32>
    %3 = vector.shape_cast %2 : vector<1x2x16x32xf32> to vector<2x16x32xf32>
    %4 = arith.negf %3 : vector<2x16x32xf32>
    %5 = math.exp %4 : vector<2x16x32xf32>
    %cst = arith.constant 1.000000e+00 : f32
    %6 = vector.broadcast %cst : f32 to vector<2x16x32xf32>
    %7 = arith.addf %6, %5 : vector<2x16x32xf32>
    %8 = arith.divf %6, %7 : vector<2x16x32xf32>
    %cst_6 = arith.constant dense<0xFF800000> : vector<2x16xf32>
    %9 = vector.multi_reduction <maximumf>, %8, %cst_6 [2] : vector<2x16x32xf32> to vector<2x16xf32>
    %10 = vector.shape_cast %9 : vector<2x16xf32> to vector<2x16x1xf32>
    %cst_7 = arith.constant 0.000000e+00 : f32
    %11 = vector.broadcast %cst_7 : f32 to vector<2x16x32xf32>
    %12 = arith.maximumf %1, %11 : vector<2x16x32xf32>
    %13 = arith.mulf %1, %8 : vector<2x16x32xf32>
    %14 = arith.subf %12, %13 : vector<2x16x32xf32>
    %15 = math.absf %1 : vector<2x16x32xf32>
    %cst_8 = arith.constant 0.000000e+00 : f32
    %16 = vector.broadcast %cst_8 : f32 to vector<2x16x32xf32>
    %17 = arith.subf %16, %15 : vector<2x16x32xf32>
    %18 = math.exp %17 : vector<2x16x32xf32>
    %19 = math.log1p %18 : vector<2x16x32xf32>
    %20 = arith.addf %14, %19 : vector<2x16x32xf32>
    %21 = vector.shape_cast %20 : vector<2x16x32xf32> to vector<1x2x16x32xf32>
    %cst_9 = arith.constant dense<0.000000e+00> : vector<1xf32>
    %22 = vector.multi_reduction <add>, %21, %cst_9 [1, 2, 3] : vector<1x2x16x32xf32> to vector<1xf32>
    %23 = vector.shape_cast %22 : vector<1xf32> to vector<1x1x1x1xf32>
    %24 = vector.extract %23[0, 0, 0, 0] : f32 from vector<1x1x1x1xf32>
    %c0_10 = arith.constant 0 : index
    %c0_11 = arith.constant 0 : index
    %c0_12 = arith.constant 0 : index
    %25 = vector.load %arg1[%c0_10, %c0_11, %c0_12] : memref<2x4x16xf32, #tpu.memory_space<vmem>>, vector<2x4x16xf32>
    %c0_13 = arith.constant 0 : index
    %c0_14 = arith.constant 0 : index
    %c0_15 = arith.constant 0 : index
    %26 = vector.load %arg2[%c0_13, %c0_14, %c0_15] : memref<2x4x16xf32, #tpu.memory_space<vmem>>, vector<2x4x16xf32>
    %27 = arith.subf %25, %26 : vector<2x4x16xf32>
    %28 = math.absf %27 : vector<2x4x16xf32>
    %cst_16 = arith.constant dense<0.000000e+00> : vector<2x16xf32>
    %29 = vector.multi_reduction <add>, %28, %cst_16 [1] : vector<2x4x16xf32> to vector<2x16xf32>
    %30 = vector.shape_cast %29 : vector<2x16xf32> to vector<2x1x16xf32>
    %31 = vector.extract_strided_slice %25 {offsets = [0, 0, 0], sizes = [2, 1, 16], strides = [1, 1, 1]} : vector<2x4x16xf32> to vector<2x1x16xf32>
    %32 = vector.extract_strided_slice %25 {offsets = [0, 1, 0], sizes = [2, 1, 16], strides = [1, 1, 1]} : vector<2x4x16xf32> to vector<2x1x16xf32>
    %33 = vector.extract_strided_slice %25 {offsets = [0, 2, 0], sizes = [2, 1, 16], strides = [1, 1, 1]} : vector<2x4x16xf32> to vector<2x1x16xf32>
    %34 = vector.extract_strided_slice %25 {offsets = [0, 3, 0], sizes = [2, 1, 16], strides = [1, 1, 1]} : vector<2x4x16xf32> to vector<2x1x16xf32>
    %35 = vector.extract_strided_slice %26 {offsets = [0, 0, 0], sizes = [2, 1, 16], strides = [1, 1, 1]} : vector<2x4x16xf32> to vector<2x1x16xf32>
    %36 = vector.extract_strided_slice %26 {offsets = [0, 1, 0], sizes = [2, 1, 16], strides = [1, 1, 1]} : vector<2x4x16xf32> to vector<2x1x16xf32>
    %37 = vector.extract_strided_slice %26 {offsets = [0, 2, 0], sizes = [2, 1, 16], strides = [1, 1, 1]} : vector<2x4x16xf32> to vector<2x1x16xf32>
    %38 = vector.extract_strided_slice %26 {offsets = [0, 3, 0], sizes = [2, 1, 16], strides = [1, 1, 1]} : vector<2x4x16xf32> to vector<2x1x16xf32>
    %cst_17 = arith.constant 5.000000e-01 : f32
    %39 = vector.broadcast %cst_17 : f32 to vector<2x1x16xf32>
    %40 = arith.mulf %33, %39 : vector<2x1x16xf32>
    %cst_18 = arith.constant 5.000000e-01 : f32
    %41 = vector.broadcast %cst_18 : f32 to vector<2x1x16xf32>
    %42 = arith.mulf %34, %41 : vector<2x1x16xf32>
    %cst_19 = arith.constant 5.000000e-01 : f32
    %43 = vector.broadcast %cst_19 : f32 to vector<2x1x16xf32>
    %44 = arith.mulf %37, %43 : vector<2x1x16xf32>
    %cst_20 = arith.constant 5.000000e-01 : f32
    %45 = vector.broadcast %cst_20 : f32 to vector<2x1x16xf32>
    %46 = arith.mulf %38, %45 : vector<2x1x16xf32>
    %47 = arith.subf %31, %40 : vector<2x1x16xf32>
    %48 = arith.addf %31, %40 : vector<2x1x16xf32>
    %49 = arith.subf %32, %42 : vector<2x1x16xf32>
    %50 = arith.addf %32, %42 : vector<2x1x16xf32>
    %51 = arith.subf %35, %44 : vector<2x1x16xf32>
    %52 = arith.addf %35, %44 : vector<2x1x16xf32>
    %53 = arith.subf %36, %46 : vector<2x1x16xf32>
    %54 = arith.addf %36, %46 : vector<2x1x16xf32>
    %55 = arith.minimumf %48, %52 : vector<2x1x16xf32>
    %56 = arith.maximumf %47, %51 : vector<2x1x16xf32>
    %57 = arith.subf %55, %56 : vector<2x1x16xf32>
    %cst_21 = arith.constant 0.000000e+00 : f32
    %58 = vector.broadcast %cst_21 : f32 to vector<2x1x16xf32>
    %59 = arith.maximumf %57, %58 : vector<2x1x16xf32>
    %60 = arith.minimumf %50, %54 : vector<2x1x16xf32>
    %61 = arith.maximumf %49, %53 : vector<2x1x16xf32>
    %62 = arith.subf %60, %61 : vector<2x1x16xf32>
    %cst_22 = arith.constant 0.000000e+00 : f32
    %63 = vector.broadcast %cst_22 : f32 to vector<2x1x16xf32>
    %64 = arith.maximumf %62, %63 : vector<2x1x16xf32>
    %65 = arith.mulf %59, %64 : vector<2x1x16xf32>
    %66 = arith.mulf %33, %34 : vector<2x1x16xf32>
    %67 = arith.mulf %37, %38 : vector<2x1x16xf32>
    %68 = arith.addf %66, %67 : vector<2x1x16xf32>
    %69 = arith.subf %68, %65 : vector<2x1x16xf32>
    %cst_23 = arith.constant 1.000000e-07 : f32
    %70 = vector.broadcast %cst_23 : f32 to vector<2x1x16xf32>
    %71 = arith.addf %69, %70 : vector<2x1x16xf32>
    %72 = tpu.reciprocal %71 {approx = true} : vector<2x1x16xf32> -> vector<2x1x16xf32>
    %73 = arith.mulf %65, %72 : vector<2x1x16xf32>
    %74 = arith.maximumf %48, %52 : vector<2x1x16xf32>
    %75 = arith.minimumf %47, %51 : vector<2x1x16xf32>
    %76 = arith.subf %74, %75 : vector<2x1x16xf32>
    %77 = arith.maximumf %50, %54 : vector<2x1x16xf32>
    %78 = arith.minimumf %49, %53 : vector<2x1x16xf32>
    %79 = arith.subf %77, %78 : vector<2x1x16xf32>
    %80 = arith.mulf %76, %79 : vector<2x1x16xf32>
    %cst_24 = arith.constant 1.000000e-07 : f32
    %81 = vector.broadcast %cst_24 : f32 to vector<2x1x16xf32>
    %82 = arith.addf %80, %81 : vector<2x1x16xf32>
    %83 = arith.subf %82, %71 : vector<2x1x16xf32>
    %84 = tpu.reciprocal %82 {approx = true} : vector<2x1x16xf32> -> vector<2x1x16xf32>
    %85 = arith.mulf %83, %84 : vector<2x1x16xf32>
    %86 = arith.subf %73, %85 : vector<2x1x16xf32>
    %cst_25 = arith.constant 1.000000e+00 : f32
    %87 = vector.broadcast %cst_25 : f32 to vector<2x1x16xf32>
    %88 = arith.subf %87, %86 : vector<2x1x16xf32>
    %cst_26 = arith.constant 5.000000e-01 : f32
    %89 = vector.broadcast %cst_26 : f32 to vector<2x16x1xf32>
    %90 = arith.cmpf olt, %10, %89 : vector<2x16x1xf32>
    %91 = arith.mulf %10, %10 : vector<2x16x1xf32>
    %92 = math.sqrt %10 : vector<2x16x1xf32>
    %93 = arith.select %90, %91, %92 : vector<2x16x1xi1>, vector<2x16x1xf32>
    %94 = vector.extract_strided_slice %30 {offsets = [0, 0, 0], sizes = [1, 1, 16], strides = [1, 1, 1]} : vector<2x1x16xf32> to vector<1x1x16xf32>
    %95 = vector.shape_cast %94 : vector<1x1x16xf32> to vector<1x16xf32>
    %96 = vector.extract_strided_slice %10 {offsets = [0, 0, 0], sizes = [1, 16, 1], strides = [1, 1, 1]} : vector<2x16x1xf32> to vector<1x16x1xf32>
    %97 = vector.shape_cast %96 : vector<1x16x1xf32> to vector<16x1xf32>
    %cst_27 = arith.constant dense<0.000000e+00> : vector<1x1xf32>
    %98 = tpu.matmul %95, %97, %cst_27 {dimension_numbers = #tpu.dot_dimension_numbers<[1], [0], [0], [1], [0, 0, 1, 1], [], []>} : vector<1x16xf32>, vector<16x1xf32>, vector<1x1xf32> -> vector<1x1xf32>
    %99 = vector.extract %98[0, 0] : f32 from vector<1x1xf32>
    %cst_28 = arith.constant 0.000000e+00 : f32
    %100 = arith.addf %cst_28, %99 : f32
    %101 = vector.extract_strided_slice %88 {offsets = [0, 0, 0], sizes = [1, 1, 16], strides = [1, 1, 1]} : vector<2x1x16xf32> to vector<1x1x16xf32>
    %102 = vector.shape_cast %101 : vector<1x1x16xf32> to vector<1x16xf32>
    %103 = vector.extract_strided_slice %93 {offsets = [0, 0, 0], sizes = [1, 16, 1], strides = [1, 1, 1]} : vector<2x16x1xf32> to vector<1x16x1xf32>
    %104 = vector.shape_cast %103 : vector<1x16x1xf32> to vector<16x1xf32>
    %cst_29 = arith.constant dense<0.000000e+00> : vector<1x1xf32>
    %105 = tpu.matmul %102, %104, %cst_29 {dimension_numbers = #tpu.dot_dimension_numbers<[1], [0], [0], [1], [0, 0, 1, 1], [], []>} : vector<1x16xf32>, vector<16x1xf32>, vector<1x1xf32> -> vector<1x1xf32>
    %106 = vector.extract %105[0, 0] : f32 from vector<1x1xf32>
    %cst_30 = arith.constant 0.000000e+00 : f32
    %107 = arith.addf %cst_30, %106 : f32
    %108 = vector.extract_strided_slice %30 {offsets = [1, 0, 0], sizes = [1, 1, 16], strides = [1, 1, 1]} : vector<2x1x16xf32> to vector<1x1x16xf32>
    %109 = vector.shape_cast %108 : vector<1x1x16xf32> to vector<1x16xf32>
    %110 = vector.extract_strided_slice %10 {offsets = [1, 0, 0], sizes = [1, 16, 1], strides = [1, 1, 1]} : vector<2x16x1xf32> to vector<1x16x1xf32>
    %111 = vector.shape_cast %110 : vector<1x16x1xf32> to vector<16x1xf32>
    %cst_31 = arith.constant dense<0.000000e+00> : vector<1x1xf32>
    %112 = tpu.matmul %109, %111, %cst_31 {dimension_numbers = #tpu.dot_dimension_numbers<[1], [0], [0], [1], [0, 0, 1, 1], [], []>} : vector<1x16xf32>, vector<16x1xf32>, vector<1x1xf32> -> vector<1x1xf32>
    %113 = vector.extract %112[0, 0] : f32 from vector<1x1xf32>
    %114 = arith.addf %100, %113 : f32
    %115 = vector.extract_strided_slice %88 {offsets = [1, 0, 0], sizes = [1, 1, 16], strides = [1, 1, 1]} : vector<2x1x16xf32> to vector<1x1x16xf32>
    %116 = vector.shape_cast %115 : vector<1x1x16xf32> to vector<1x16xf32>
    %117 = vector.extract_strided_slice %93 {offsets = [1, 0, 0], sizes = [1, 16, 1], strides = [1, 1, 1]} : vector<2x16x1xf32> to vector<1x16x1xf32>
    %118 = vector.shape_cast %117 : vector<1x16x1xf32> to vector<16x1xf32>
    %cst_32 = arith.constant dense<0.000000e+00> : vector<1x1xf32>
    %119 = tpu.matmul %116, %118, %cst_32 {dimension_numbers = #tpu.dot_dimension_numbers<[1], [0], [0], [1], [0, 0, 1, 1], [], []>} : vector<1x16xf32>, vector<16x1xf32>, vector<1x1xf32> -> vector<1x1xf32>
    %120 = vector.extract %119[0, 0] : f32 from vector<1x1xf32>
    %121 = arith.addf %107, %120 : f32
    %122 = tpu.iota {dimensions = array<i32: 1>} : vector<8x128xi32>
    %123 = tpu.iota {dimensions = array<i32: 0>} : vector<8x128xi32>
    %c0_i32 = arith.constant 0 : i32
    %124 = vector.broadcast %c0_i32 : i32 to vector<8x128xi32>
    %125 = arith.cmpi eq, %123, %124 : vector<8x128xi32>
    %c0_i32_33 = arith.constant 0 : i32
    %126 = vector.broadcast %c0_i32_33 : i32 to vector<8x128xi32>
    %127 = arith.cmpi eq, %122, %126 : vector<8x128xi32>
    %128 = arith.andi %125, %127 : vector<8x128xi1>
    %cst_34 = arith.constant 0.000000e+00 : f32
    %129 = vector.broadcast %114 : f32 to vector<8x128xf32>
    %130 = vector.broadcast %cst_34 : f32 to vector<8x128xf32>
    %131 = arith.select %128, %129, %130 : vector<8x128xi1>, vector<8x128xf32>
    %c0_i32_35 = arith.constant 0 : i32
    %132 = vector.broadcast %c0_i32_35 : i32 to vector<8x128xi32>
    %133 = arith.cmpi eq, %123, %132 : vector<8x128xi32>
    %c1_i32 = arith.constant 1 : i32
    %134 = vector.broadcast %c1_i32 : i32 to vector<8x128xi32>
    %135 = arith.cmpi eq, %122, %134 : vector<8x128xi32>
    %136 = arith.andi %133, %135 : vector<8x128xi1>
    %137 = vector.broadcast %121 : f32 to vector<8x128xf32>
    %138 = arith.select %136, %137, %131 : vector<8x128xi1>, vector<8x128xf32>
    %c0_i32_36 = arith.constant 0 : i32
    %139 = vector.broadcast %c0_i32_36 : i32 to vector<8x128xi32>
    %140 = arith.cmpi eq, %123, %139 : vector<8x128xi32>
    %c2_i32 = arith.constant 2 : i32
    %141 = vector.broadcast %c2_i32 : i32 to vector<8x128xi32>
    %142 = arith.cmpi eq, %122, %141 : vector<8x128xi32>
    %143 = arith.andi %140, %142 : vector<8x128xi1>
    %144 = vector.broadcast %24 : f32 to vector<8x128xf32>
    %145 = arith.select %143, %144, %138 : vector<8x128xi1>, vector<8x128xf32>
    %c0_37 = arith.constant 0 : index
    %c0_38 = arith.constant 0 : index
    %c0_39 = arith.constant 0 : index
    %146 = vector.load %arg5[%c0_37, %c0_38, %c0_39] : memref<1x8x128xf32, #tpu.memory_space<vmem>>, vector<1x8x128xf32>
    %147 = vector.shape_cast %146 : vector<1x8x128xf32> to vector<8x128xf32>
    %148 = vector.shape_cast %145 : vector<8x128xf32> to vector<1x8x128xf32>
    tpu.vector_store %arg5[%c0_37, %c0_38, %c0_39], %148 {strides = array<i32>} : memref<1x8x128xf32, #tpu.memory_space<vmem>>, vector<1x8x128xf32>,
    return
  }
  func.func @transform_0(%arg0: i32) -> (i32, i32, i32) {
    %c0_i32 = arith.constant 0 : i32
    %c0_i32_0 = arith.constant 0 : i32
    %c0_i32_1 = arith.constant 0 : i32
    return %arg0, %c0_i32, %c0_i32_0 : i32, i32, i32
  }
  func.func @transform_1(%arg0: i32) -> (i32, i32, i32) {
    %c0_i32 = arith.constant 0 : i32
    %c0_i32_0 = arith.constant 0 : i32
    %c0_i32_1 = arith.constant 0 : i32
    return %arg0, %c0_i32, %c0_i32_0 : i32, i32, i32
  }
  func.func @transform_2(%arg0: i32) -> (i32, i32, i32, i32) {
    %c2_i32 = arith.constant 2 : i32
    %c0_i32 = arith.constant 0 : i32
    %c0_i32_0 = arith.constant 0 : i32
    %c0_i32_1 = arith.constant 0 : i32
    return %c2_i32, %arg0, %c0_i32, %c0_i32_0 : i32, i32, i32, i32
  }
  func.func @transform_3(%arg0: i32) -> (i32, i32, i32, i32) {
    %c2_i32 = arith.constant 2 : i32
    %c0_i32 = arith.constant 0 : i32
    %c0_i32_0 = arith.constant 0 : i32
    %c0_i32_1 = arith.constant 0 : i32
    return %c2_i32, %arg0, %c0_i32, %c0_i32_0 : i32, i32, i32, i32
  }
  func.func @transform_4(%arg0: i32) -> (i32, i32, i32) {
    %c0_i32 = arith.constant 0 : i32
    %c0_i32_0 = arith.constant 0 : i32
    %c0_i32_1 = arith.constant 0 : i32
    return %arg0, %c0_i32, %c0_i32_0 : i32, i32, i32
  }
}

</mosaic_0001>

<llo_original>
// kernel: tpu_custom_call.1
$region0: #{tpu_custom_call.1}
  #allocation0 [shape = 'u32[]', space=smem, size = 0x4, offset = 0x4, fixed_abs, tag = 'smem constant byte address 0x4 - core index']
  #allocation1 [shape = 'u32[144,128]{1,0:T(1,128)}', space=vmem, size = 0x12000, scoped, tag = 'internal scratch']
  %s0 = inlined_call_operand.hbm [shape: f32[4,4,16], index: 0, kind: input, shape index: {}]
  %s1 = inlined_call_operand.hbm [shape: f32[4,4,16], index: 1, kind: input, shape index: {}]
  %s2 = inlined_call_operand.hbm [shape: f32[3,4,24,32], index: 2, kind: input, shape index: {}]
  %s3 = inlined_call_operand.hbm [shape: f32[3,4,24,32], index: 3, kind: input, shape index: {}]
  %s4 = inlined_call_operand.hbm [shape: f32[2,8,128], index: 4, kind: output, shape index: {}]
  %s5 = sld [smem:[#allocation0]]
  $region65: #{tpu_custom_call.1} parent=0
    _
  %s7 = ssub.s32 1, %s5
  %s8 = scalar_select 0, %s7, %s5
  $region1: #{tpu_custom_call.1} parent=0
    #allocation2 [shape = 'u8[8192]{0}', space=vmem, size = 0x2000, scoped, tag = 'input window, operand 0']
    #allocation3 [shape = 's32[2]{0}', space=sflag, size = 0x8, scoped, tag = 'scoped memory for tpu_custom_call.1']
    #allocation4 [shape = 's32[2]{0}', space=sflag, size = 0x8, scoped, tag = 'scoped memory for tpu_custom_call.1']
    #allocation5 [shape = 'u8[8192]{0}', space=vmem, size = 0x2000, scoped, tag = 'input window, operand 1']
    #allocation6 [shape = 's32[2]{0}', space=sflag, size = 0x8, scoped, tag = 'scoped memory for tpu_custom_call.1']
    #allocation7 [shape = 'u8[49152]{0}', space=vmem, size = 0xc000, scoped, tag = 'input window, operand 2']
    #allocation8 [shape = 'u8[49152]{0}', space=vmem, size = 0xc000, scoped, tag = 'input window, operand 3']
    #allocation9 [shape = 's32[2]{0}', space=sflag, size = 0x8, scoped, tag = 'scoped memory for tpu_custom_call.1']
    #allocation10 [shape = 'u8[8192]{0}', space=vmem, size = 0x2000, scoped, tag = 'output window, operand 0']
    %9 = vsyncpa [#allocation3], 0
    %s10 = scalar_lea.sflag [#allocation3], 1
    %11 = vsyncpa %s10, 0
    %12 = vsyncpa [#allocation6], 0
    %s13 = scalar_lea.sflag [#allocation6], 1
    %14 = vsyncpa %s13, 0
    %15 = vsyncpa [#allocation9], 0
    %s16 = scalar_lea.sflag [#allocation9], 1
    %17 = vsyncpa %s16, 0
    %18 = vsyncpa [#allocation4], 0
    %s19 = scalar_lea.sflag [#allocation4], 1
    %20 = vsyncpa %s19, 0
    loop: start=0, step=1, limit=4
    $region2: #{tpu_custom_call.1} parent=1 // loop_pre_header
      _
    $region3: #{tpu_custom_call.1} parent=1 // loop_header
      %s22 = sphi 0, %s26
      %p23 = scmp.ge.s32.totalorder %s22, 4
      %s32 = sphi 0, %s34
      %s35 = sphi 0, %s32
      %s36 = sphi 0, %s35
      %s52 = sphi 0, %s36
      %s58 = sphi 0, %s60
      %s61 = sphi 0, %s58
      %s62 = sphi 0, %s61
      %s78 = sphi 0, %s62
      %s84 = sphi 0, %s86
      %s87 = sphi 0, %s84
      %s88 = sphi 0, %s87
      %s104 = sphi 0, %s88
      %s110 = sphi 0, %s112
      %s113 = sphi 0, %s110
      %s114 = sphi 0, %s113
      %s130 = sphi 0, %s114
      %s136 = sphi 0, %s138
      %s139 = sphi 0, %s136
      %s140 = sphi 0, %s139
      %s156 = sphi 0, %s140
    $region4: #{tpu_custom_call.1} parent=1 // loop_header_branch
      %25 = sbr.rel (%p23) target = $region8
    $region5: #{tpu_custom_call.1} parent=1 // loop_body
      %s27 = ssub.s32 %s22, 1
      %s28 = ssub.s32 %s22, 2
      %s29 = sadd.s32 %s22, 1
      %s30 = ssub.s32 %s22, %s29
      %p31 = scmp.eq.s32.totalorder %s30, 0
      %s33 = sadd.s32 %s32, 1
      %s34 = scalar_select %p31, %s32, %s33
      %p37 = pneg %p31
      %p38 = scmp.eq.s32.totalorder %s22, 1
      %p39 = por %p37, %p38
      %p40 = scmp.ne.s32.totalorder %s32, %s35
      %p41 = scmp.eq.s32.totalorder %s22, 0
      %p42 = por %p40, %p41
      %p43 = scmp.ne.s32.totalorder %s32, %s35
      %p44 = scmp.eq.s32.totalorder %s27, 1
      %p45 = por %p43, %p44
      %p46 = scmp.ne.s32.totalorder %s35, %s36
      %p47 = scmp.eq.s32.totalorder %s27, 0
      %p48 = por %p46, %p47
      %p49 = scmp.ne.s32.totalorder %s35, %s36
      %p50 = scmp.eq.s32.totalorder %s28, 1
      %p51 = por %p49, %p50
      %p53 = scmp.ne.s32.totalorder %s36, %s52
      %p54 = scmp.eq.s32.totalorder %s28, 0
      %p55 = por %p53, %p54
      %s56 = ssub.s32 %s22, %s29
      %p57 = scmp.eq.s32.totalorder %s56, 0
      %s59 = sadd.s32 %s58, 1
      %s60 = scalar_select %p57, %s58, %s59
      %p63 = pneg %p57
      %p64 = scmp.eq.s32.totalorder %s22, 1
      %p65 = por %p63, %p64
      %p66 = scmp.ne.s32.totalorder %s58, %s61
      %p67 = scmp.eq.s32.totalorder %s22, 0
      %p68 = por %p66, %p67
      %p69 = scmp.ne.s32.totalorder %s58, %s61
      %p70 = scmp.eq.s32.totalorder %s27, 1
      %p71 = por %p69, %p70
      %p72 = scmp.ne.s32.totalorder %s61, %s62
      %p73 = scmp.eq.s32.totalorder %s27, 0
      %p74 = por %p72, %p73
      %p75 = scmp.ne.s32.totalorder %s61, %s62
      %p76 = scmp.eq.s32.totalorder %s28, 1
      %p77 = por %p75, %p76
      %p79 = scmp.ne.s32.totalorder %s62, %s78
      %p80 = scmp.eq.s32.totalorder %s28, 0
      %p81 = por %p79, %p80
      %s82 = ssub.s32 %s22, %s29
      %p83 = scmp.eq.s32.totalorder %s82, 0
      %s85 = sadd.s32 %s84, 1
      %s86 = scalar_select %p83, %s84, %s85
      %p89 = pneg %p83
      %p90 = scmp.eq.s32.totalorder %s22, 1
      %p91 = por %p89, %p90
      %p92 = scmp.ne.s32.totalorder %s84, %s87
      %p93 = scmp.eq.s32.totalorder %s22, 0
      %p94 = por %p92, %p93
      %p95 = scmp.ne.s32.totalorder %s84, %s87
      %p96 = scmp.eq.s32.totalorder %s27, 1
      %p97 = por %p95, %p96
      %p98 = scmp.ne.s32.totalorder %s87, %s88
      %p99 = scmp.eq.s32.totalorder %s27, 0
      %p100 = por %p98, %p99
      %p101 = scmp.ne.s32.totalorder %s87, %s88
      %p102 = scmp.eq.s32.totalorder %s28, 1
      %p103 = por %p101, %p102
      %p105 = scmp.ne.s32.totalorder %s88, %s104
      %p106 = scmp.eq.s32.totalorder %s28, 0
      %p107 = por %p105, %p106
      %s108 = ssub.s32 %s22, %s29
      %p109 = scmp.eq.s32.totalorder %s108, 0
      %s111 = sadd.s32 %s110, 1
      %s112 = scalar_select %p109, %s110, %s111
      %p115 = pneg %p109
      %p116 = scmp.eq.s32.totalorder %s22, 1
      %p117 = por %p115, %p116
      %p118 = scmp.ne.s32.totalorder %s110, %s113
      %p119 = scmp.eq.s32.totalorder %s22, 0
      %p120 = por %p118, %p119
      %p121 = scmp.ne.s32.totalorder %s110, %s113
      %p122 = scmp.eq.s32.totalorder %s27, 1
      %p123 = por %p121, %p122
      %p124 = scmp.ne.s32.totalorder %s113, %s114
      %p125 = scmp.eq.s32.totalorder %s27, 0
      %p126 = por %p124, %p125
      %p127 = scmp.ne.s32.totalorder %s113, %s114
      %p128 = scmp.eq.s32.totalorder %s28, 1
      %p129 = por %p127, %p128
      %p131 = scmp.ne.s32.totalorder %s114, %s130
      %p132 = scmp.eq.s32.totalorder %s28, 0
      %p133 = por %p131, %p132
      %s134 = ssub.s32 %s22, %s29
      %p135 = scmp.eq.s32.totalorder %s134, 0
      %s137 = sadd.s32 %s136, 1
      %s138 = scalar_select %p135, %s136, %s137
      %p141 = pneg %p135
      %p142 = scmp.eq.s32.totalorder %s22, 1
      %p143 = por %p141, %p142
      %p144 = scmp.ne.s32.totalorder %s136, %s139
      %p145 = scmp.eq.s32.totalorder %s22, 0
      %p146 = por %p144, %p145
      %p147 = scmp.ne.s32.totalorder %s136, %s139
      %p148 = scmp.eq.s32.totalorder %s27, 1
      %p149 = por %p147, %p148
      %p150 = scmp.ne.s32.totalorder %s139, %s140
      %p151 = scmp.eq.s32.totalorder %s27, 0
      %p152 = por %p150, %p151
      %p153 = scmp.ne.s32.totalorder %s139, %s140
      %p154 = scmp.eq.s32.totalorder %s28, 1
      %p155 = por %p153, %p154
      %p157 = scmp.ne.s32.totalorder %s140, %s156
      %p158 = scmp.eq.s32.totalorder %s28, 0
      %p159 = por %p157, %p158
      %p160 = scmp.le.s32.totalorder 1, %s22
      %p161 = scmp.lt.s32.totalorder %s22, 3
      %p162 = pnand %p160, %p161
      %p163 = pneg %p162
      // Predicated region
      $region9: #{tpu_custom_call.1} parent=5 // pred_check
        _
      $region10: #{tpu_custom_call.1} parent=5 // pred_check_branch
        %165 = sbr.rel (%p162) target = $region12
      $region11: #{tpu_custom_call.1} parent=5 // pred_region
        %s166 = ssub.s32 %s22, 1
      $region12: #{tpu_custom_call.1} parent=5 // pred_fallthru
        _
      %p167 = scmp.lt.s32.totalorder %s22, 2
      // Predicated region
      $region13: #{tpu_custom_call.1} parent=5 // pred_check
        %p168 = pneg %p167
      $region14: #{tpu_custom_call.1} parent=5 // pred_check_branch
        %170 = sbr.rel (%p168) target = $region16
      $region15: #{tpu_custom_call.1} parent=5 // pred_region
        // Predicated region
        $region17: #{tpu_custom_call.1} parent=15 // pred_check
          %p171 = pneg %p42
        $region18: #{tpu_custom_call.1} parent=15 // pred_check_branch
          %173 = sbr.rel (%p171) target = $region20
        $region19: #{tpu_custom_call.1} parent=15 // pred_region
          %s174 = sand.u32 %s32, 1
          %s175 = scalar_lea.sflag [#allocation3], %s174
          %s176 = sand.u32 %s32, 1
          %s177 = smul.addr %s176, 8
          %s178 = scalar_lea.vmem [#allocation2], %s177
          %s179 = smul.u32 2, %s22
          %s181 = ssub.s32 128, 128
          %182 = vsyncadd %s175, %s181
          %s183 = smul.addr %s179, 64
          %s184 = scalar_lea.hbm %s0, %s183
          %s185 = sshll.u32 %s178, 4
          %s186 = int_to_ptr.vmem [resolvable:$true] %s185
          %191 = dma.hbm_to_vmem [thread:$0]  %s184, 128, %s186, %s175, 64, 64, 4
        $region20: #{tpu_custom_call.1} parent=15 // pred_fallthru
          _
        // Predicated region
        $region21: #{tpu_custom_call.1} parent=15 // pred_check
          %p192 = pneg %p68
        $region22: #{tpu_custom_call.1} parent=15 // pred_check_branch
          %194 = sbr.rel (%p192) target = $region24
        $region23: #{tpu_custom_call.1} parent=15 // pred_region
          %s195 = sand.u32 %s22, 1
          %s196 = scalar_lea.sflag [#allocation6], %s195
          %s197 = sand.u32 %s58, 1
          %s198 = smul.addr %s197, 8
          %s199 = scalar_lea.vmem [#allocation5], %s198
          %s200 = smul.u32 2, %s22
          %s202 = ssub.s32 128, 128
          %203 = vsyncadd %s196, %s202
          %s204 = smul.addr %s200, 64
          %s205 = scalar_lea.hbm %s1, %s204
          %s206 = sshll.u32 %s199, 4
          %s207 = int_to_ptr.vmem [resolvable:$true] %s206
          %212 = dma.hbm_to_vmem [thread:$0]  %s205, 128, %s207, %s196, 64, 64, 4
        $region24: #{tpu_custom_call.1} parent=15 // pred_fallthru
          _
        // Predicated region
        $region25: #{tpu_custom_call.1} parent=15 // pred_check
          %p213 = pneg %p94
        $region26: #{tpu_custom_call.1} parent=15 // pred_check_branch
          %215 = sbr.rel (%p213) target = $region28
        $region27: #{tpu_custom_call.1} parent=15 // pred_region
          %s216 = sand.u32 %s22, 1
          %s217 = scalar_lea.sflag [#allocation6], %s216
          %s218 = sand.u32 %s84, 1
          %s219 = smul.addr %s218, 48
          %s220 = scalar_lea.vmem [#allocation7], %s219
          %s221 = smul.u32 2, %s22
          %s223 = ssub.s32 768, 768
          %224 = vsyncadd %s217, %s223
          %s225 = smul.addr %s221, 3
          %s226 = sadd.s32 %s225, 24
          %s227 = smul.addr %s226, 128
          %s228 = scalar_lea.hbm %s2, %s227
          %s229 = sshll.u32 %s220, 4
          %s230 = int_to_ptr.vmem [resolvable:$true] %s229
          %235 = dma.hbm_to_vmem [thread:$0]  %s228, 768, %s230, %s217, 128, 128, 8
        $region28: #{tpu_custom_call.1} parent=15 // pred_fallthru
          _
        // Predicated region
        $region29: #{tpu_custom_call.1} parent=15 // pred_check
          %p236 = pneg %p120
        $region30: #{tpu_custom_call.1} parent=15 // pred_check_branch
          %238 = sbr.rel (%p236) target = $region32
        $region31: #{tpu_custom_call.1} parent=15 // pred_region
          %s239 = sand.u32 %s110, 1
          %s240 = scalar_lea.sflag [#allocation9], %s239
          %s241 = sand.u32 %s110, 1
          %s242 = smul.addr %s241, 48
          %s243 = scalar_lea.vmem [#allocation8], %s242
          %s244 = smul.u32 2, %s22
          %s246 = ssub.s32 768, 768
          %247 = vsyncadd %s240, %s246
          %s248 = smul.addr %s244, 3
          %s249 = sadd.s32 %s248, 24
          %s250 = smul.addr %s249, 128
          %s251 = scalar_lea.hbm %s3, %s250
          %s252 = sshll.u32 %s243, 4
          %s253 = int_to_ptr.vmem [resolvable:$true] %s252
          %258 = dma.hbm_to_vmem [thread:$0]  %s251, 768, %s253, %s240, 128, 128, 8
        $region32: #{tpu_custom_call.1} parent=15 // pred_fallthru
          _
      $region16: #{tpu_custom_call.1} parent=5 // pred_fallthru
        _
      %p259 = scmp.le.s32.totalorder 1, %s22
      %p260 = scmp.lt.s32.totalorder %s22, 3
      %p261 = pnand %p259, %p260
      %p262 = pneg %p261
      // Predicated region
      $region33: #{tpu_custom_call.1} parent=5 // pred_check
        _
      $region34: #{tpu_custom_call.1} parent=5 // pred_check_branch
        %264 = sbr.rel (%p261) target = $region36
      $region35: #{tpu_custom_call.1} parent=5 // pred_region
        %s265 = ssub.s32 %s22, 1
        %s266 = sand.u32 %s35, 1
        %s267 = scalar_lea.sflag [#allocation3], %s266
        %s268 = sand.u32 %s35, 1
        %s269 = smul.addr %s268, 8
        %s270 = scalar_lea.vmem [#allocation2], %s269
        // Predicated region
        $region37: #{tpu_custom_call.1} parent=35 // pred_check
          %p271 = pneg %p48
        $region38: #{tpu_custom_call.1} parent=35 // pred_check_branch
          %273 = sbr.rel (%p271) target = $region40
        $region39: #{tpu_custom_call.1} parent=35 // pred_region
          %274 = dma.done %s267, 128
        $region40: #{tpu_custom_call.1} parent=35 // pred_fallthru
          _
        %s275 = sand.u32 %s27, 1
        %s276 = scalar_lea.sflag [#allocation6], %s275
        %s277 = sand.u32 %s61, 1
        %s278 = smul.addr %s277, 8
        %s279 = scalar_lea.vmem [#allocation5], %s278
        // Predicated region
        $region41: #{tpu_custom_call.1} parent=35 // pred_check
          %p280 = pneg %p74
        $region42: #{tpu_custom_call.1} parent=35 // pred_check_branch
          %282 = sbr.rel (%p280) target = $region44
        $region43: #{tpu_custom_call.1} parent=35 // pred_region
          %283 = dma.done %s276, 128
        $region44: #{tpu_custom_call.1} parent=35 // pred_fallthru
          _
        %s284 = sand.u32 %s27, 1
        %s285 = scalar_lea.sflag [#allocation6], %s284
        %s286 = sand.u32 %s87, 1
        %s287 = smul.addr %s286, 48
        %s288 = scalar_lea.vmem [#allocation7], %s287
        // Predicated region
        $region45: #{tpu_custom_call.1} parent=35 // pred_check
          %p289 = pneg %p100
        $region46: #{tpu_custom_call.1} parent=35 // pred_check_branch
          %291 = sbr.rel (%p289) target = $region48
        $region47: #{tpu_custom_call.1} parent=35 // pred_region
          %292 = dma.done %s285, 768
        $region48: #{tpu_custom_call.1} parent=35 // pred_fallthru
          _
        %s293 = sand.u32 %s113, 1
        %s294 = scalar_lea.sflag [#allocation9], %s293
        %s295 = sand.u32 %s113, 1
        %s296 = smul.addr %s295, 48
        %s297 = scalar_lea.vmem [#allocation8], %s296
        // Predicated region
        $region49: #{tpu_custom_call.1} parent=35 // pred_check
          %p298 = pneg %p126
        $region50: #{tpu_custom_call.1} parent=35 // pred_check_branch
          %300 = sbr.rel (%p298) target = $region52
        $region51: #{tpu_custom_call.1} parent=35 // pred_region
          %301 = dma.done %s294, 768
        $region52: #{tpu_custom_call.1} parent=35 // pred_fallthru
          _
        %s302 = sand.u32 %s35, 1
        %s303 = scalar_lea.sflag [#allocation3], %s302
        %s304 = sand.u32 %s35, 1
        %s305 = smul.addr %s304, 8
        %s306 = scalar_lea.vmem [#allocation2], %s305
        %p307 = pneg %p48
        %p308 = pneg %p45
        %s309 = sand.u32 %s27, 1
        %s310 = scalar_lea.sflag [#allocation6], %s309
        %s311 = sand.u32 %s61, 1
        %s312 = smul.addr %s311, 8
        %s313 = scalar_lea.vmem [#allocation5], %s312
        %p314 = pneg %p74
        %p315 = pneg %p71
        %s316 = sand.u32 %s27, 1
        %s317 = scalar_lea.sflag [#allocation6], %s316
        %s318 = sand.u32 %s87, 1
        %s319 = smul.addr %s318, 48
        %s320 = scalar_lea.vmem [#allocation7], %s319
        %p321 = pneg %p100
        %p322 = pneg %p97
        %s323 = sand.u32 %s113, 1
        %s324 = scalar_lea.sflag [#allocation9], %s323
        %s325 = sand.u32 %s113, 1
        %s326 = smul.addr %s325, 48
        %s327 = scalar_lea.vmem [#allocation8], %s326
        %p328 = pneg %p126
        %p329 = pneg %p123
        %p330 = pneg %p152
        %p331 = pneg %p149
        %s332 = sand.u32 %s139, 1
        %s333 = scalar_lea.sflag [#allocation4], %s332
        %s334 = sand.u32 %s139, 1
        %s335 = smul.addr %s334, 8
        %s336 = scalar_lea.vmem [#allocation10], %s335
        %s337 = smul.u32 2, %s27
        %s338 = smul.u32 2, %s27
        %s339 = smul.u32 2, %s27
        %s340 = smul.u32 2, %s27
        %v341 = vld [vmem:[%s288 + $0x8] sm:$0xff]
        %v342 = vld [vmem:[%s288 + $0x10] sm:$0xff]
        %v343 = vld [vmem:[%s288 + $0x20] sm:$0xff]
        %v344 = vld [vmem:[%s288 + $0x28] sm:$0xff]
        %v345 = vld [vmem:[%s297 + $0x8] sm:$0xff]
        %v346 = vld [vmem:[%s297 + $0x10] sm:$0xff]
        %v347 = vld [vmem:[%s297 + $0x20] sm:$0xff]
        %v348 = vld [vmem:[%s297 + $0x28] sm:$0xff]
        %v349 = vxor.u32 %v345, 2147483648
        %v350 = vxor.u32 %v346, 2147483648
        %v351 = vxor.u32 %v347, 2147483648
        %v352 = vxor.u32 %v348, 2147483648
        %v353 = vmul.f32 %v349, 1.442695
        %v354 = vpow.pop %v353
        %v355 = vmul.f32 %v350, 1.442695
        %v356 = vpow.pop %v355
        %v357 = vmul.f32 %v351, 1.442695
        %v358 = vpow.pop %v357
        %v359 = vmul.f32 %v352, 1.442695
        %v360 = vpow.pop %v359
        %v361 = vadd.f32 %v354, 1.0
        %v362 = vadd.f32 %v356, 1.0
        %v363 = vadd.f32 %v358, 1.0
        %v364 = vadd.f32 %v360, 1.0
        %v365 = vrcp.pop %v361
        %v366 = vmul.f32 1.0, %v365
        %v367 = vrcp.pop %v362
        %v368 = vmul.f32 1.0, %v367
        %v369 = vrcp.pop %v363
        %v370 = vmul.f32 1.0, %v369
        %v371 = vrcp.pop %v364
        %v372 = vmul.f32 1.0, %v371
        %vm373 = vcmask 261120
        %v374 = vsel %vm373, %v366, -inf
        %375 = vmax.xlane.f32.xlu0 %v374
        %v376 = vpop.xlane.xlu0 %375
        %v377 = vsel %vm373, %v368, -inf
        %378 = vmax.xlane.f32.xlu0 %v377
        %v379 = vpop.xlane.xlu0 %378
        %v380 = vsel %vm373, %v370, -inf
        %381 = vmax.xlane.f32.xlu0 %v380
        %v382 = vpop.xlane.xlu0 %381
        %v383 = vsel %vm373, %v372, -inf
        %384 = vmax.xlane.f32.xlu0 %v383
        %v385 = vpop.xlane.xlu0 %384
        %v386 = vmax.f32 %v341, 0.0
        %v387 = vmax.f32 %v342, 0.0
        %v388 = vmax.f32 %v343, 0.0
        %v389 = vmax.f32 %v344, 0.0
        %v390 = vmul.f32 %v341, %v366
        %v391 = vmul.f32 %v342, %v368
        %v392 = vmul.f32 %v343, %v370
        %v393 = vmul.f32 %v344, %v372
        %v394 = vsub.f32 %v386, %v390
        %v395 = vsub.f32 %v387, %v391
        %v396 = vsub.f32 %v388, %v392
        %v397 = vsub.f32 %v389, %v393
        %v398 = vand.u32 2147483647, %v341
        %v399 = vand.u32 2147483647, %v342
        %v400 = vand.u32 2147483647, %v343
        %v401 = vand.u32 2147483647, %v344
        %v402 = vsub.f32 0.0, %v398
        %v403 = vsub.f32 0.0, %v399
        %v404 = vsub.f32 0.0, %v400
        %v405 = vsub.f32 0.0, %v401
        %v406 = vmul.f32 %v402, 1.442695
        %v407 = vpow.pop %v406
        %v408 = vmul.f32 %v403, 1.442695
        %v409 = vpow.pop %v408
        %v410 = vmul.f32 %v404, 1.442695
        %v411 = vpow.pop %v410
        %v412 = vmul.f32 %v405, 1.442695
        %v413 = vpow.pop %v412
        %v414 = vadd.f32 %v407, 1.0
        %v415 = vlog2.pop %v414
        %v416 = vmul.f32 %v415, 0.6931472
        %v417 = vmul.f32 -0.5, %v407
        %v418 = vadd.f32 %v417, 1.0
        %v419 = vmul.f32 %v418, %v407
        %v420 = vand.u32 2147483647, %v407
        %vm421 = vcmp.lt.f32.partialorder %v420, 0.0004427343
        %v422 = vsel %vm421, %v419, %v416
        %v423 = vadd.f32 %v409, 1.0
        %v424 = vlog2.pop %v423
        %v425 = vmul.f32 %v424, 0.6931472
        %v426 = vmul.f32 -0.5, %v409
        %v427 = vadd.f32 %v426, 1.0
        %v428 = vmul.f32 %v427, %v409
        %v429 = vand.u32 2147483647, %v409
        %vm430 = vcmp.lt.f32.partialorder %v429, 0.0004427343
        %v431 = vsel %vm430, %v428, %v425
        %v432 = vadd.f32 %v411, 1.0
        %v433 = vlog2.pop %v432
        %v434 = vmul.f32 %v433, 0.6931472
        %v435 = vmul.f32 -0.5, %v411
        %v436 = vadd.f32 %v435, 1.0
        %v437 = vmul.f32 %v436, %v411
        %v438 = vand.u32 2147483647, %v411
        %vm439 = vcmp.lt.f32.partialorder %v438, 0.0004427343
        %v440 = vsel %vm439, %v437, %v434
        %v441 = vadd.f32 %v413, 1.0
        %v442 = vlog2.pop %v441
        %v443 = vmul.f32 %v442, 0.6931472
        %v444 = vmul.f32 -0.5, %v413
        %v445 = vadd.f32 %v444, 1.0
        %v446 = vmul.f32 %v445, %v413
        %v447 = vand.u32 2147483647, %v413
        %vm448 = vcmp.lt.f32.partialorder %v447, 0.0004427343
        %v449 = vsel %vm448, %v446, %v443
        %v450 = vadd.f32 %v394, %v422
        %v451 = vadd.f32 %v395, %v431
        %v452 = vadd.f32 %v396, %v440
        %v453 = vadd.f32 %v397, %v449
        %v454 = vsel %vm373, %v450, 0.0
        %v455 = vsel %vm373, %v451, 0.0
        %v456 = vadd.f32 %v454, %v455
        %v457 = vsel %vm373, %v452, 0.0
        %v458 = vadd.f32 %v456, %v457
        %v459 = vsel %vm373, %v453, 0.0
        %v460 = vadd.f32 %v458, %v459
        %461 = vadd.xlane.f32.xlu0 %v460
        %v462 = vpop.xlane.xlu0 %461
        %v463 = vrot.slane %v462, 4
        %v464 = vadd.f32 %v462, %v463
        %v465 = vrot.slane %v464, 2
        %v466 = vadd.f32 %v464, %v465
        %v467 = vrot.slane %v466, 1
        %v468 = vadd.f32 %v466, %v467
        %s469 = vtos %v468
        %v470 = vld [vmem:[%s270] sm:$0xf]
        %v471 = vld [vmem:[%s270 + $0x4] sm:$0xf]
        %v472 = vld [vmem:[%s279] sm:$0xf]
        %v473 = vld [vmem:[%s279 + $0x4] sm:$0xf]
        %v474 = vsub.f32 %v470, %v472
        %v475 = vsub.f32 %v471, %v473
        %v476 = vand.u32 2147483647, %v474
        %v477 = vand.u32 2147483647, %v475
        %vm478 = vcmask 125952
        %v479 = vsel %vm478, %v476, 0.0
        %v480 = vrot.slane %v479, 4
        %v481 = vadd.f32 %v479, %v480
        %v482 = vrot.slane %v481, 2
        %v483 = vadd.f32 %v481, %v482
        %v484 = vrot.slane %v483, 1
        %v485 = vadd.f32 %v483, %v484
        %v486 = vsel %vm478, %v477, 0.0
        %v487 = vrot.slane %v486, 4
        %v488 = vadd.f32 %v486, %v487
        %v489 = vrot.slane %v488, 2
        %v490 = vadd.f32 %v488, %v489
        %v491 = vrot.slane %v490, 1
        %v492 = vadd.f32 %v490, %v491
        %v493 = vmul.f32 %v470, 0.5
        %v494 = vmul.f32 %v471, 0.5
        %v495 = vmul.f32 %v472, 0.5
        %v496 = vmul.f32 %v473, 0.5
        %v499 = vrot.slane %v493, 2
        %v500 = vrot.slane %v494, 2
        %v503 = vsub.f32 %v470, %v499
        %v504 = vsub.f32 %v471, %v500
        %v505 = vadd.f32 %v470, %v499
        %v506 = vadd.f32 %v471, %v500
        %v509 = vrot.slane %v495, 2
        %v510 = vrot.slane %v496, 2
        %v513 = vsub.f32 %v472, %v509
        %v514 = vsub.f32 %v473, %v510
        %v515 = vadd.f32 %v472, %v509
        %v516 = vadd.f32 %v473, %v510
        %v517 = vmin.f32 %v505, %v515
        %v518 = vmin.f32 %v506, %v516
        %v519 = vmax.f32 %v503, %v513
        %v520 = vmax.f32 %v504, %v514
        %v521 = vsub.f32 %v517, %v519
        %v522 = vsub.f32 %v518, %v520
        %v523 = vmax.f32 %v521, 0.0
        %v524 = vmax.f32 %v522, 0.0
        %v527 = vrot.slane %v523, 1
        %v528 = vrot.slane %v524, 1
        %v531 = vmul.f32 %v523, %v527
        %v532 = vmul.f32 %v524, %v528
        %v535 = vrot.slane %v470, 1
        %v536 = vrot.slane %v471, 1
        %v539 = vmul.f32 %v470, %v535
        %v540 = vmul.f32 %v471, %v536
        %v543 = vrot.slane %v472, 1
        %v544 = vrot.slane %v473, 1
        %v547 = vmul.f32 %v472, %v543
        %v548 = vmul.f32 %v473, %v544
        %v549 = vadd.f32 %v539, %v547
        %v550 = vadd.f32 %v540, %v548
        %v553 = vrot.slane %v531, 6
        %v554 = vrot.slane %v532, 6
        %v557 = vsub.f32 %v549, %v553
        %v558 = vsub.f32 %v550, %v554
        %v559 = vadd.f32 %v557, 1e-07
        %v560 = vadd.f32 %v558, 1e-07
        %v561 = vrcp.pop %v559
        %v562 = vrcp.pop %v560
        %v565 = vrot.slane %v561, 2
        %v566 = vrot.slane %v562, 2
        %v569 = vmul.f32 %v531, %v565
        %v570 = vmul.f32 %v532, %v566
        %v571 = vmax.f32 %v505, %v515
        %v572 = vmax.f32 %v506, %v516
        %v573 = vmin.f32 %v503, %v513
        %v574 = vmin.f32 %v504, %v514
        %v575 = vsub.f32 %v571, %v573
        %v576 = vsub.f32 %v572, %v574
        %v579 = vrot.slane %v575, 1
        %v580 = vrot.slane %v576, 1
        %v583 = vmul.f32 %v575, %v579
        %v584 = vmul.f32 %v576, %v580
        %v585 = vadd.f32 %v583, 1e-07
        %v586 = vadd.f32 %v584, 1e-07
        %v589 = vrot.slane %v559, 2
        %v590 = vrot.slane %v560, 2
        %v593 = vsub.f32 %v585, %v589
        %v594 = vsub.f32 %v586, %v590
        %v595 = vrcp.pop %v585
        %v596 = vrcp.pop %v586
        %v597 = vmul.f32 %v593, %v595
        %v598 = vmul.f32 %v594, %v596
        %v599 = vsub.f32 %v569, %v597
        %v600 = vsub.f32 %v570, %v598
        %v601 = vsub.f32 1.0, %v599
        %v602 = vsub.f32 1.0, %v600
        %vm603 = vcmp.lt.f32.partialorder %v376, 0.5
        %vm604 = vcmp.lt.f32.partialorder %v379, 0.5
        %vm605 = vcmp.lt.f32.partialorder %v382, 0.5
        %vm606 = vcmp.lt.f32.partialorder %v385, 0.5
        %v607 = vmul.f32 %v376, %v376
        %v608 = vmul.f32 %v379, %v379
        %v609 = vmul.f32 %v382, %v382
        %v610 = vmul.f32 %v385, %v385
        %v611 = vrsqrt.pop %v376
        %v612 = vmul.f32 %v376, %v611
        %vm613 = vcmp.eq.f32.partialorder %v376, inf
        %v614 = vsel %vm613, %v376, %v612
        %vm615 = vcmp.eq.f32.partialorder %v376, 0.0
        %v616 = vand.u32 %v376, 2147483648
        %v617 = vsel %vm615, %v616, %v614
        %v618 = vrsqrt.pop %v379
        %v619 = vmul.f32 %v379, %v618
        %vm620 = vcmp.eq.f32.partialorder %v379, inf
        %v621 = vsel %vm620, %v379, %v619
        %vm622 = vcmp.eq.f32.partialorder %v379, 0.0
        %v623 = vand.u32 %v379, 2147483648
        %v624 = vsel %vm622, %v623, %v621
        %v625 = vrsqrt.pop %v382
        %v626 = vmul.f32 %v382, %v625
        %vm627 = vcmp.eq.f32.partialorder %v382, inf
        %v628 = vsel %vm627, %v382, %v626
        %vm629 = vcmp.eq.f32.partialorder %v382, 0.0
        %v630 = vand.u32 %v382, 2147483648
        %v631 = vsel %vm629, %v630, %v628
        %v632 = vrsqrt.pop %v385
        %v633 = vmul.f32 %v385, %v632
        %vm634 = vcmp.eq.f32.partialorder %v385, inf
        %v635 = vsel %vm634, %v385, %v633
        %vm636 = vcmp.eq.f32.partialorder %v385, 0.0
        %v637 = vand.u32 %v385, 2147483648
        %v638 = vsel %vm636, %v637, %v635
        %v639 = vsel %vm603, %v607, %v617
        %v640 = vsel %vm604, %v608, %v624
        %v641 = vsel %vm605, %v609, %v631
        %v642 = vsel %vm606, %v610, %v638
        %vm643 = vcmask 130048
        %v645 = vsel %vm643, %v485, 0
        %647 = vmatprep.subr.mxu0 0.0
        %648 = vmatpush1.msra.mxu0 0.0
        %649 = vmatprep.subr.mxu0 0.0
        %650 = vmatpush1.msra.mxu0 0.0
        %651 = vmatprep.subr.mxu0 0.0
        %652 = vmatpush1.msra.mxu0 0.0
        %653 = vmatprep.subr.mxu0 0.0
        %654 = vmatpush1.msra.mxu0 0.0
        %655 = vmatprep.subr.mxu0 0.0
        %656 = vmatpush1.msra.mxu0 0.0
        %657 = vmatprep.subr.mxu0 0.0
        %658 = vmatpush1.msra.mxu0 0.0
        %659 = vmatprep.subr.mxu0 0.0
        %660 = vmatpush1.msra.mxu0 0.0
        %661 = vmatprep.subr.mxu0 0.0
        %662 = vmatpush1.msra.mxu0 0.0
        %663 = vmatprep.subr.mxu0 0.0
        %664 = vmatpush1.msra.mxu0 0.0
        %665 = vmatprep.subr.mxu0 0.0
        %666 = vmatpush1.msra.mxu0 0.0
        %667 = vmatprep.subr.mxu0 0.0
        %668 = vmatpush1.msra.mxu0 0.0
        %669 = vmatprep.subr.mxu0 0.0
        %670 = vmatpush1.msra.mxu0 0.0
        %671 = vmatprep.subr.mxu0 0.0
        %672 = vmatpush1.msra.mxu0 0.0
        %673 = vmatprep.subr.mxu0 0.0
        %674 = vmatpush1.msra.mxu0 0.0
        %675 = vmatprep.subr.mxu0 0.0
        %676 = vmatpush1.msra.mxu0 %v379
        %677 = vmatprep.subr.mxu0 0.0
        %678 = vmatpush1.msra.mxu0 %v376
        %679 = vmatprep.subr.mxu0 0.0
        %680 = vmatpush2.msra.mxu0 0.0
        %681 = vmatprep.subr.mxu0 0.0
        %682 = vmatpush2.msra.mxu0 0.0
        %683 = vmatprep.subr.mxu0 0.0
        %684 = vmatpush2.msra.mxu0 0.0
        %685 = vmatprep.subr.mxu0 0.0
        %686 = vmatpush2.msra.mxu0 0.0
        %687 = vmatprep.subr.mxu0 0.0
        %688 = vmatpush2.msra.mxu0 0.0
        %689 = vmatprep.subr.mxu0 0.0
        %690 = vmatpush2.msra.mxu0 0.0
        %691 = vmatprep.subr.mxu0 0.0
        %692 = vmatpush2.msra.mxu0 0.0
        %693 = vmatprep.subr.mxu0 0.0
        %694 = vmatpush2.msra.mxu0 0.0
        %695 = vmatprep.subr.mxu0 0.0
        %696 = vmatpush2.msra.mxu0 0.0
        %697 = vmatprep.subr.mxu0 0.0
        %698 = vmatpush2.msra.mxu0 0.0
        %699 = vmatprep.subr.mxu0 0.0
        %700 = vmatpush2.msra.mxu0 0.0
        %701 = vmatprep.subr.mxu0 0.0
        %702 = vmatpush2.msra.mxu0 0.0
        %703 = vmatprep.subr.mxu0 0.0
        %704 = vmatpush2.msra.mxu0 0.0
        %705 = vmatprep.subr.mxu0 0.0
        %706 = vmatpush2.msra.mxu0 0.0
        %707 = vmatprep.subr.mxu0 0.0
        %708 = vmatpush2.msra.mxu0 0.0
        %709 = vmatprep.subr.mxu0 0.0
        %710 = vmatpush2.msra.mxu0 0.0
        %711 = vmatprep.mubr.f32.mxu0 0.0
        %712 = vmatmul.mubr.f32.gmra.mxu0 %v645
        %v713 = vpop.f32.mrf.mxu0
        %v714 = vadd.f32 0.0, %v713
        %v715 = vpop.f32.mrf.mxu0
        %716 = vdwg.mxu0
        %s717 = vtos %v714
        %s718 = sadd.f32 %s717, 0.0
        %v720 = vsel %vm643, %v601, 0
        %722 = vmatprep.subr.mxu0 0.0
        %723 = vmatpush1.msra.mxu0 0.0
        %724 = vmatprep.subr.mxu0 0.0
        %725 = vmatpush1.msra.mxu0 0.0
        %726 = vmatprep.subr.mxu0 0.0
        %727 = vmatpush1.msra.mxu0 0.0
        %728 = vmatprep.subr.mxu0 0.0
        %729 = vmatpush1.msra.mxu0 0.0
        %730 = vmatprep.subr.mxu0 0.0
        %731 = vmatpush1.msra.mxu0 0.0
        %732 = vmatprep.subr.mxu0 0.0
        %733 = vmatpush1.msra.mxu0 0.0
        %734 = vmatprep.subr.mxu0 0.0
        %735 = vmatpush1.msra.mxu0 0.0
        %736 = vmatprep.subr.mxu0 0.0
        %737 = vmatpush1.msra.mxu0 0.0
        %738 = vmatprep.subr.mxu0 0.0
        %739 = vmatpush1.msra.mxu0 0.0
        %740 = vmatprep.subr.mxu0 0.0
        %741 = vmatpush1.msra.mxu0 0.0
        %742 = vmatprep.subr.mxu0 0.0
        %743 = vmatpush1.msra.mxu0 0.0
        %744 = vmatprep.subr.mxu0 0.0
        %745 = vmatpush1.msra.mxu0 0.0
        %746 = vmatprep.subr.mxu0 0.0
        %747 = vmatpush1.msra.mxu0 0.0
        %748 = vmatprep.subr.mxu0 0.0
        %749 = vmatpush1.msra.mxu0 0.0
        %750 = vmatprep.subr.mxu0 0.0
        %751 = vmatpush1.msra.mxu0 %v640
        %752 = vmatprep.subr.mxu0 0.0
        %753 = vmatpush1.msra.mxu0 %v639
        %754 = vmatprep.subr.mxu0 0.0
        %755 = vmatpush2.msra.mxu0 0.0
        %756 = vmatprep.subr.mxu0 0.0
        %757 = vmatpush2.msra.mxu0 0.0
        %758 = vmatprep.subr.mxu0 0.0
        %759 = vmatpush2.msra.mxu0 0.0
        %760 = vmatprep.subr.mxu0 0.0
        %761 = vmatpush2.msra.mxu0 0.0
        %762 = vmatprep.subr.mxu0 0.0
        %763 = vmatpush2.msra.mxu0 0.0
        %764 = vmatprep.subr.mxu0 0.0
        %765 = vmatpush2.msra.mxu0 0.0
        %766 = vmatprep.subr.mxu0 0.0
        %767 = vmatpush2.msra.mxu0 0.0
        %768 = vmatprep.subr.mxu0 0.0
        %769 = vmatpush2.msra.mxu0 0.0
        %770 = vmatprep.subr.mxu0 0.0
        %771 = vmatpush2.msra.mxu0 0.0
        %772 = vmatprep.subr.mxu0 0.0
        %773 = vmatpush2.msra.mxu0 0.0
        %774 = vmatprep.subr.mxu0 0.0
        %775 = vmatpush2.msra.mxu0 0.0
        %776 = vmatprep.subr.mxu0 0.0
        %777 = vmatpush2.msra.mxu0 0.0
        %778 = vmatprep.subr.mxu0 0.0
        %779 = vmatpush2.msra.mxu0 0.0
        %780 = vmatprep.subr.mxu0 0.0
        %781 = vmatpush2.msra.mxu0 0.0
        %782 = vmatprep.subr.mxu0 0.0
        %783 = vmatpush2.msra.mxu0 0.0
        %784 = vmatprep.subr.mxu0 0.0
        %785 = vmatpush2.msra.mxu0 0.0
        %786 = vmatprep.mubr.f32.mxu0 0.0
        %787 = vmatmul.mubr.f32.gmra.mxu0 %v720
        %v788 = vpop.f32.mrf.mxu0
        %v789 = vadd.f32 0.0, %v788
        %v790 = vpop.f32.mrf.mxu0
        %791 = vdwg.mxu0
        %s792 = vtos %v789
        %s793 = sadd.f32 %s792, 0.0
        %v795 = vsel %vm643, %v492, 0
        %797 = vmatprep.subr.mxu0 0.0
        %798 = vmatpush1.msra.mxu0 0.0
        %799 = vmatprep.subr.mxu0 0.0
        %800 = vmatpush1.msra.mxu0 0.0
        %801 = vmatprep.subr.mxu0 0.0
        %802 = vmatpush1.msra.mxu0 0.0
        %803 = vmatprep.subr.mxu0 0.0
        %804 = vmatpush1.msra.mxu0 0.0
        %805 = vmatprep.subr.mxu0 0.0
        %806 = vmatpush1.msra.mxu0 0.0
        %807 = vmatprep.subr.mxu0 0.0
        %808 = vmatpush1.msra.mxu0 0.0
        %809 = vmatprep.subr.mxu0 0.0
        %810 = vmatpush1.msra.mxu0 0.0
        %811 = vmatprep.subr.mxu0 0.0
        %812 = vmatpush1.msra.mxu0 0.0
        %813 = vmatprep.subr.mxu0 0.0
        %814 = vmatpush1.msra.mxu0 0.0
        %815 = vmatprep.subr.mxu0 0.0
        %816 = vmatpush1.msra.mxu0 0.0
        %817 = vmatprep.subr.mxu0 0.0
        %818 = vmatpush1.msra.mxu0 0.0
        %819 = vmatprep.subr.mxu0 0.0
        %820 = vmatpush1.msra.mxu0 0.0
        %821 = vmatprep.subr.mxu0 0.0
        %822 = vmatpush1.msra.mxu0 0.0
        %823 = vmatprep.subr.mxu0 0.0
        %824 = vmatpush1.msra.mxu0 0.0
        %825 = vmatprep.subr.mxu0 0.0
        %826 = vmatpush1.msra.mxu0 %v385
        %827 = vmatprep.subr.mxu0 0.0
        %828 = vmatpush1.msra.mxu0 %v382
        %829 = vmatprep.subr.mxu0 0.0
        %830 = vmatpush2.msra.mxu0 0.0
        %831 = vmatprep.subr.mxu0 0.0
        %832 = vmatpush2.msra.mxu0 0.0
        %833 = vmatprep.subr.mxu0 0.0
        %834 = vmatpush2.msra.mxu0 0.0
        %835 = vmatprep.subr.mxu0 0.0
        %836 = vmatpush2.msra.mxu0 0.0
        %837 = vmatprep.subr.mxu0 0.0
        %838 = vmatpush2.msra.mxu0 0.0
        %839 = vmatprep.subr.mxu0 0.0
        %840 = vmatpush2.msra.mxu0 0.0
        %841 = vmatprep.subr.mxu0 0.0
        %842 = vmatpush2.msra.mxu0 0.0
        %843 = vmatprep.subr.mxu0 0.0
        %844 = vmatpush2.msra.mxu0 0.0
        %845 = vmatprep.subr.mxu0 0.0
        %846 = vmatpush2.msra.mxu0 0.0
        %847 = vmatprep.subr.mxu0 0.0
        %848 = vmatpush2.msra.mxu0 0.0
        %849 = vmatprep.subr.mxu0 0.0
        %850 = vmatpush2.msra.mxu0 0.0
        %851 = vmatprep.subr.mxu0 0.0
        %852 = vmatpush2.msra.mxu0 0.0
        %853 = vmatprep.subr.mxu0 0.0
        %854 = vmatpush2.msra.mxu0 0.0
        %855 = vmatprep.subr.mxu0 0.0
        %856 = vmatpush2.msra.mxu0 0.0
        %857 = vmatprep.subr.mxu0 0.0
        %858 = vmatpush2.msra.mxu0 0.0
        %859 = vmatprep.subr.mxu0 0.0
        %860 = vmatpush2.msra.mxu0 0.0
        %861 = vmatprep.mubr.f32.mxu0 0.0
        %862 = vmatmul.mubr.f32.gmra.mxu0 %v795
        %v863 = vpop.f32.mrf.mxu0
        %v864 = vadd.f32 0.0, %v863
        %v865 = vpop.f32.mrf.mxu0
        %866 = vdwg.mxu0
        %s867 = vtos %v864
        %s868 = sadd.f32 %s718, %s867
        %v870 = vsel %vm643, %v602, 0
        %872 = vmatprep.subr.mxu0 0.0
        %873 = vmatpush1.msra.mxu0 0.0
        %874 = vmatprep.subr.mxu0 0.0
        %875 = vmatpush1.msra.mxu0 0.0
        %876 = vmatprep.subr.mxu0 0.0
        %877 = vmatpush1.msra.mxu0 0.0
        %878 = vmatprep.subr.mxu0 0.0
        %879 = vmatpush1.msra.mxu0 0.0
        %880 = vmatprep.subr.mxu0 0.0
        %881 = vmatpush1.msra.mxu0 0.0
        %882 = vmatprep.subr.mxu0 0.0
        %883 = vmatpush1.msra.mxu0 0.0
        %884 = vmatprep.subr.mxu0 0.0
        %885 = vmatpush1.msra.mxu0 0.0
        %886 = vmatprep.subr.mxu0 0.0
        %887 = vmatpush1.msra.mxu0 0.0
        %888 = vmatprep.subr.mxu0 0.0
        %889 = vmatpush1.msra.mxu0 0.0
        %890 = vmatprep.subr.mxu0 0.0
        %891 = vmatpush1.msra.mxu0 0.0
        %892 = vmatprep.subr.mxu0 0.0
        %893 = vmatpush1.msra.mxu0 0.0
        %894 = vmatprep.subr.mxu0 0.0
        %895 = vmatpush1.msra.mxu0 0.0
        %896 = vmatprep.subr.mxu0 0.0
        %897 = vmatpush1.msra.mxu0 0.0
        %898 = vmatprep.subr.mxu0 0.0
        %899 = vmatpush1.msra.mxu0 0.0
        %900 = vmatprep.subr.mxu0 0.0
        %901 = vmatpush1.msra.mxu0 %v642
        %902 = vmatprep.subr.mxu0 0.0
        %903 = vmatpush1.msra.mxu0 %v641
        %904 = vmatprep.subr.mxu0 0.0
        %905 = vmatpush2.msra.mxu0 0.0
        %906 = vmatprep.subr.mxu0 0.0
        %907 = vmatpush2.msra.mxu0 0.0
        %908 = vmatprep.subr.mxu0 0.0
        %909 = vmatpush2.msra.mxu0 0.0
        %910 = vmatprep.subr.mxu0 0.0
        %911 = vmatpush2.msra.mxu0 0.0
        %912 = vmatprep.subr.mxu0 0.0
        %913 = vmatpush2.msra.mxu0 0.0
        %914 = vmatprep.subr.mxu0 0.0
        %915 = vmatpush2.msra.mxu0 0.0
        %916 = vmatprep.subr.mxu0 0.0
        %917 = vmatpush2.msra.mxu0 0.0
        %918 = vmatprep.subr.mxu0 0.0
        %919 = vmatpush2.msra.mxu0 0.0
        %920 = vmatprep.subr.mxu0 0.0
        %921 = vmatpush2.msra.mxu0 0.0
        %922 = vmatprep.subr.mxu0 0.0
        %923 = vmatpush2.msra.mxu0 0.0
        %924 = vmatprep.subr.mxu0 0.0
        %925 = vmatpush2.msra.mxu0 0.0
        %926 = vmatprep.subr.mxu0 0.0
        %927 = vmatpush2.msra.mxu0 0.0
        %928 = vmatprep.subr.mxu0 0.0
        %929 = vmatpush2.msra.mxu0 0.0
        %930 = vmatprep.subr.mxu0 0.0
        %931 = vmatpush2.msra.mxu0 0.0
        %932 = vmatprep.subr.mxu0 0.0
        %933 = vmatpush2.msra.mxu0 0.0
        %934 = vmatprep.subr.mxu0 0.0
        %935 = vmatpush2.msra.mxu0 0.0
        %936 = vmatprep.mubr.f32.mxu0 0.0
        %937 = vmatmul.mubr.f32.gmra.mxu0 %v870
        %v938 = vpop.f32.mrf.mxu0
        %v939 = vadd.f32 0.0, %v938
        %v940 = vpop.f32.mrf.mxu0
        %941 = vdwg.mxu0
        %s942 = vtos %v939
        %s943 = sadd.f32 %s793, %s942
        %v944 = vlaneseq
        %v945 = vand.u32 %v944, 127
        %v946 = vlaneseq
        %v947 = vshrl.u32 %v946, 7
        %vm948 = vcmp.eq.s32.totalorder %v947, 0
        %vm949 = vcmp.eq.s32.totalorder %v945, 0
        %vm950 = vmand %vm948, %vm949
        %v951 = vstv %s868
        %v952 = vsel %vm950, %v951, 0.0
        %vm953 = vcmp.eq.s32.totalorder %v945, 1
        %vm954 = vmand %vm948, %vm953
        %v955 = vstv %s943
        %v956 = vsel %vm954, %v955, %v952
        %vm957 = vcmp.eq.s32.totalorder %v945, 2
        %vm958 = vmand %vm948, %vm957
        %v959 = vstv %s469
        %v960 = vsel %vm958, %v959, %v956
        %961 = vst [vmem:[%s336] sm:$0xff] %v960
        %s962 = sand.u32 %s139, 1
        %s963 = scalar_lea.sflag [#allocation4], %s962
        %s964 = sand.u32 %s139, 1
        %s965 = smul.addr %s964, 8
        %s966 = scalar_lea.vmem [#allocation10], %s965
        // Predicated region
        $region53: #{tpu_custom_call.1} parent=35 // pred_check
          %p967 = pneg %p149
        $region54: #{tpu_custom_call.1} parent=35 // pred_check_branch
          %969 = sbr.rel (%p967) target = $region56
        $region55: #{tpu_custom_call.1} parent=35 // pred_region
          %s971 = ssub.s32 128, 128
          %972 = vsyncadd %s963, %s971
          %s973 = smul.addr %s27, 128
          %s974 = scalar_lea.hbm %s4, %s973
          %s976 = sshll.u32 %s966, 4
          %s977 = int_to_ptr.vmem [resolvable:$true] %s976
          %979 = dma.vmem_to_hbm [thread:$0]  %s977, 128, %s974, %s963
        $region56: #{tpu_custom_call.1} parent=35 // pred_fallthru
          _
      $region36: #{tpu_custom_call.1} parent=5 // pred_fallthru
        _
      %p980 = scmp.le.s32.totalorder 2, %s22
      // Predicated region
      $region57: #{tpu_custom_call.1} parent=5 // pred_check
        %p981 = pneg %p980
      $region58: #{tpu_custom_call.1} parent=5 // pred_check_branch
        %983 = sbr.rel (%p981) target = $region60
      $region59: #{tpu_custom_call.1} parent=5 // pred_region
        %s984 = ssub.s32 %s22, 2
        // Predicated region
        $region61: #{tpu_custom_call.1} parent=59 // pred_check
          %p985 = pneg %p155
        $region62: #{tpu_custom_call.1} parent=59 // pred_check_branch
          %987 = sbr.rel (%p985) target = $region64
        $region63: #{tpu_custom_call.1} parent=59 // pred_region
          %s988 = sand.u32 %s140, 1
          %s989 = scalar_lea.sflag [#allocation4], %s988
          %s990 = sand.u32 %s140, 1
          %s991 = smul.addr %s990, 8
          %s992 = scalar_lea.vmem [#allocation10], %s991
          %993 = dma.done %s989, 128
        $region64: #{tpu_custom_call.1} parent=59 // pred_fallthru
          _
      $region60: #{tpu_custom_call.1} parent=5 // pred_fallthru
        _
    $region6: #{tpu_custom_call.1} parent=1 // loop_footer
      %s26 = sadd.s32 1, %s22
    $region7: #{tpu_custom_call.1} parent=1 // loop_footer_branch
      %21 = sbr.rel target = $region3
    $region8: #{tpu_custom_call.1} parent=1 // loop_exit
      _
    %994 = vsyncpa [#allocation3], 1
    %s995 = scalar_lea.sflag [#allocation3], 1
    %996 = vsyncpa %s995, 1
    %997 = vsyncpa [#allocation6], 1
    %s998 = scalar_lea.sflag [#allocation6], 1
    %999 = vsyncpa %s998, 1
    %1000 = vsyncpa [#allocation9], 1
    %s1001 = scalar_lea.sflag [#allocation9], 1
    %1002 = vsyncpa %s1001, 1
    %1003 = vsyncpa [#allocation4], 1
    %s1004 = scalar_lea.sflag [#allocation4], 1
    %1005 = vsyncpa %s1004, 1

</llo_original>
